<compile_context>
chip_gen: v7x
topology: tpu7x:2x2x1
jax: 0.10.0
libtpu: 0.0.40
codegen_flags: <defaults>
</compile_context>

<pallas_src>
import functools

import jax
import jax.numpy as jnp
from jax import lax
from jax.experimental import pallas as pl
from jax.experimental.pallas import tpu as pltpu


def _round_up(x, m):
    return (x + m - 1) // m * m


def _combined_loss_kernel(logits_ref, target_ref,
                          total_ref, ce_ref, region_ref,
                          ce_acc, tp_acc, denom_acc,
                          *, hw, n_pixels, ce_weight, dice_weight):
    b = pl.program_id(0)
    i = pl.program_id(1)
    is_first = jnp.logical_and(b == 0, i == 0)
    is_last = jnp.logical_and(b == pl.num_programs(0) - 1,
                              i == pl.num_programs(1) - 1)

    @pl.when(is_first)
    def _():
        ce_acc[...] = jnp.zeros_like(ce_acc)
        tp_acc[...] = jnp.zeros_like(tp_acc)
        denom_acc[...] = jnp.zeros_like(denom_acc)

    x = logits_ref[0].astype(jnp.float32)          # (C, T): pixels on lanes
    t = target_ref[0].astype(jnp.int32)            # (1, T)
    num_classes, tile = x.shape

    # Tail mask for the last (partial) pixel tile of each image.
    pix = lax.broadcasted_iota(jnp.int32, (1, tile), 1) + i * tile
    valid = pix < hw                               # (1, T) bool

    cls = lax.broadcasted_iota(jnp.int32, (num_classes, tile), 0)
    is_tgt = cls == t                              # (C, T) target one-hot (bool)

    # --- cross entropy: logsumexp(logits) - logits[target] (class axis = sublanes)
    m = jnp.max(x, axis=0, keepdims=True)          # (1, T)
    lse = m + jnp.log(jnp.sum(jnp.exp(x - m), axis=0, keepdims=True))
    logit_t = jnp.sum(jnp.where(is_tgt, x, 0.0), axis=0, keepdims=True)
    # Select (not multiply) so garbage in out-of-bounds tail lanes cannot leak.
    ce = jnp.where(valid, lse - logit_t, 0.0)      # (1, T)
    ce_acc[...] = ce_acc[...] + jnp.sum(ce, axis=1, keepdims=True)

    # --- hard predictions: argmax over classes (first index on ties) ---
    pred_idx = jnp.min(jnp.where(x == m, cls, num_classes), axis=0, keepdims=True)

    # Validity mask folded directly into the compares (no separate *validf muls).
    agree = jnp.logical_and(pred_idx == t, valid)                  # (1, T)
    tp_oh = jnp.logical_and(is_tgt, agree).astype(jnp.float32)     # pred == tgt == c
    tgt_oh = jnp.logical_and(is_tgt, valid).astype(jnp.float32)    # TP + FN one-hot
    pred_oh = jnp.logical_and(cls == pred_idx, valid).astype(jnp.float32)  # TP + FP

    # In-tile lane reduction -> tiny (C, 1) partials; no wide accumulator RMW.
    tp_acc[...] = tp_acc[...] + jnp.sum(tp_oh, axis=1, keepdims=True)
    denom_acc[...] = denom_acc[...] + jnp.sum(pred_oh + tgt_oh, axis=1, keepdims=True)

    @pl.when(is_last)
    def _():
        ce_mean = ce_acc[...] / jnp.float32(n_pixels)              # (1, 1)
        tp = tp_acc[...]                                           # (C, 1)
        denom = denom_acc[...]                                     # 2TP + FP + FN
        support = denom > 0.0
        dice_c = jnp.where(support, 2.0 * tp / jnp.where(support, denom, 1.0), 0.0)
        n_sup = jnp.sum(support.astype(jnp.float32))
        dice_macro = jnp.sum(dice_c) / jnp.maximum(n_sup, 1.0)
        region = 1.0 - dice_macro
        ce_ref[...] = ce_mean
        region_ref[...] = jnp.full_like(region_ref, region)
        total_ref[...] = ce_weight * ce_mean + dice_weight * region


def combined_loss(pred_nchw, target_bhw, ce_weight=0.5, dice_weight=0.5,
                  target_block_bytes=2 << 20, vmem_budget_bytes=36 << 20):
    """pred_nchw: (B, C, H, W) float logits; target_bhw: (B, H, W) int class ids."""
    B, C, H, W = pred_nchw.shape
    HW = H * W

    # Free reshapes only (no transpose, no dtype copy in HBM).
    logits = pred_nchw.reshape(B, C, HW)
    target = target_bhw.reshape(B, 1, HW)          # native dtype; cast in-kernel

    itemsize = jnp.dtype(pred_nchw.dtype).itemsize
    t_itemsize = jnp.dtype(target_bhw.dtype).itemsize

    # Adaptive tile: ~target_block_bytes of logits per block (>= 8192 pixels),
    # multiple of 128 lanes, shrunk only if the VMEM estimate exceeds budget.
    tile_hw = max(8192, target_block_bytes // max(1, C * itemsize))
    tile_hw = min(tile_hw, _round_up(HW, 128))
    tile_hw = _round_up(tile_hw, 128)

    def vmem_estimate(tile):
        in_bufs = 2 * tile * (C * itemsize + t_itemsize)   # double-buffered inputs
        interm = (8 * C + 16) * tile * 4                   # generous f32/i32 temporaries
        return in_bufs + interm + (1 << 20)                # slack

    while tile_hw > 256 and vmem_estimate(tile_hw) > vmem_budget_bytes:
        tile_hw = _round_up(max(256, tile_hw // 2), 128)

    num_tiles = pl.cdiv(HW, tile_hw)
    grid = (B, num_tiles)

    # Explicit VMEM limit (scoped default is 16 MiB on v5e / 32 MiB on v6e & v7x);
    # keep it generation-safe (v7x has only 64 MiB physical per TC).
    vmem_limit = int(min(max(vmem_estimate(tile_hw), 16 << 20), 48 << 20))

    kernel = functools.partial(_combined_loss_kernel,
                               hw=HW, n_pixels=B * HW,
                               ce_weight=float(ce_weight),
                               dice_weight=float(dice_weight))

    total, ce, region = pl.pallas_call(
        kernel,
        out_shape=(jax.ShapeDtypeStruct((1, 1), jnp.float32),
                   jax.ShapeDtypeStruct((1, 1), jnp.float32),
                   jax.ShapeDtypeStruct((1, 1), jnp.float32)),
        grid_spec=pltpu.PrefetchScalarGridSpec(
            num_scalar_prefetch=0,
            grid=grid,
            in_specs=[pl.BlockSpec((1, C, tile_hw), lambda b, i: (b, 0, i)),
                      pl.BlockSpec((1, 1, tile_hw), lambda b, i: (b, 0, i))],
            out_specs=[pl.BlockSpec((1, 1), lambda b, i: (0, 0)),
                       pl.BlockSpec((1, 1), lambda b, i: (0, 0)),
                       pl.BlockSpec((1, 1), lambda b, i: (0, 0))],
            scratch_shapes=[pltpu.VMEM((1, 1), jnp.float32),   # CE sum
                            pltpu.VMEM((C, 1), jnp.float32),   # per-class TP
                            pltpu.VMEM((C, 1), jnp.float32)]), # per-class 2TP+FP+FN
        compiler_params=pltpu.CompilerParams(
            dimension_semantics=("arbitrary", "arbitrary"),
            vmem_limit_bytes=vmem_limit),
    )(logits, target)
    return total[0, 0], ce[0, 0], region[0, 0]


def _reference(pred_nchw, target_bhw, ce_weight=0.5, dice_weight=0.5):
    B, C, H, W = pred_nchw.shape
    logits = jnp.transpose(pred_nchw, (0, 2, 3, 1)).reshape(-1, C).astype(jnp.float32)
    t = target_bhw.reshape(-1).astype(jnp.int32)
    lse = jax.scipy.special.logsumexp(logits, axis=1)
    ce = jnp.mean(lse - jnp.take_along_axis(logits, t[:, None], axis=1)[:, 0])
    pc = jnp.argmax(logits, axis=1)
    oh_p = jax.nn.one_hot(pc, C, dtype=jnp.float32)
    oh_t = jax.nn.one_hot(t, C, dtype=jnp.float32)
    tp = jnp.sum(oh_p * oh_t, axis=0)
    fp = jnp.sum(oh_p * (1.0 - oh_t), axis=0)
    fn = jnp.sum((1.0 - oh_p) * oh_t, axis=0)
    denom = 2.0 * tp + fp + fn
    sup = denom > 0.0
    dice = jnp.where(sup, 2.0 * tp / jnp.where(sup, denom, 1.0), 0.0)
    dice_macro = jnp.sum(dice) / jnp.maximum(jnp.sum(sup.astype(jnp.float32)), 1.0)
    return ce_weight * ce + dice_weight * (1.0 - dice_macro)


if __name__ == "__main__":
    B, C, H, W = 2, 4, 16, 16
    key = jax.random.PRNGKey(0)
    k_pred, k_tgt = jax.random.split(key)
    pred = jax.random.normal(k_pred, (B, C, H, W), dtype=jnp.float32)
    target = jax.random.randint(k_tgt, (B, H, W), 0, C, dtype=jnp.int32)

    total, ce, region = combined_loss(pred, target)
    total = jax.block_until_ready(total)

    ref = jax.block_until_ready(_reference(pred, target))
    assert jnp.abs(total - ref) < 1e-5, (total, ref)
    print("KERNEL_OK")
</pallas_src>

<mosaic_0001>
module attributes {stable_mosaic.version = 11 : i64} {
  func.func @_combined_loss_kernel(%arg0: i32, %arg1: i32, %arg2: memref<1x4x256xf32, #tpu.memory_space<vmem>>, %arg3: memref<1x1x256xi32, #tpu.memory_space<vmem>>, %arg4: memref<1x1xf32, #tpu.memory_space<vmem>>, %arg5: memref<1x1xf32, #tpu.memory_space<vmem>>, %arg6: memref<1x1xf32, #tpu.memory_space<vmem>>, %arg7: memref<1x1xf32, #tpu.memory_space<vmem>>, %arg8: memref<4x1xf32, #tpu.memory_space<vmem>>, %arg9: memref<4x1xf32, #tpu.memory_space<vmem>>) attributes {dimension_semantics = [#tpu.dimension_semantics<arbitrary>, #tpu.dimension_semantics<arbitrary>], iteration_bounds = array<i64: 2, 1>, scalar_prefetch = 0 : i64, scratch_operands = 3 : i64, tpu.core_type = #tpu.core_type<tc>, window_params = [{transform_indices = @transform_0, window_bounds = array<i64: 1, 4, 256>}, {transform_indices = @transform_1, window_bounds = array<i64: 1, 1, 256>}, {pipeline_mode = #tpu.pipeline_mode<synchronous>, transform_indices = @transform_2, window_bounds = array<i64: 1, 1>}, {pipeline_mode = #tpu.pipeline_mode<synchronous>, transform_indices = @transform_3, window_bounds = array<i64: 1, 1>}, {pipeline_mode = #tpu.pipeline_mode<synchronous>, transform_indices = @transform_4, window_bounds = array<i64: 1, 1>}]} {
    %c0_i32 = arith.constant 0 : i32
    %0 = arith.cmpi eq, %arg0, %c0_i32 : i32
    %c0_i32_0 = arith.constant 0 : i32
    %1 = arith.cmpi eq, %arg1, %c0_i32_0 : i32
    %2 = arith.andi %0, %1 : i1
    %c1_i32 = arith.constant 1 : i32
    %3 = arith.cmpi eq, %arg0, %c1_i32 : i32
    %c0_i32_1 = arith.constant 0 : i32
    %4 = arith.cmpi eq, %arg1, %c0_i32_1 : i32
    %5 = arith.andi %3, %4 : i1
    %6 = arith.extui %2 : i1 to i32
    %c0_i32_2 = arith.constant 0 : i32
    %7 = arith.cmpi ne, %6, %c0_i32_2 : i32
    scf.if %7 {
      %cst_30 = arith.constant 0.000000e+00 : f32
      %77 = vector.broadcast %cst_30 : f32 to vector<1x1xf32>
      %c0_31 = arith.constant 0 : index
      %c0_32 = arith.constant 0 : index
      %78 = vector.load %arg7[%c0_31, %c0_32] : memref<1x1xf32, #tpu.memory_space<vmem>>, vector<1x1xf32>
      tpu.vector_store %arg7[%c0_31, %c0_32], %77 {strides = array<i32>} : memref<1x1xf32, #tpu.memory_space<vmem>>, vector<1x1xf32>,
      %cst_33 = arith.constant 0.000000e+00 : f32
      %79 = vector.broadcast %cst_33 : f32 to vector<4x1xf32>
      %c0_34 = arith.constant 0 : index
      %c0_35 = arith.constant 0 : index
      %80 = vector.load %arg8[%c0_34, %c0_35] : memref<4x1xf32, #tpu.memory_space<vmem>>, vector<4x1xf32>
      tpu.vector_store %arg8[%c0_34, %c0_35], %79 {strides = array<i32>} : memref<4x1xf32, #tpu.memory_space<vmem>>, vector<4x1xf32>,
      %cst_36 = arith.constant 0.000000e+00 : f32
      %81 = vector.broadcast %cst_36 : f32 to vector<4x1xf32>
      %c0_37 = arith.constant 0 : index
      %c0_38 = arith.constant 0 : index
      %82 = vector.load %arg9[%c0_37, %c0_38] : memref<4x1xf32, #tpu.memory_space<vmem>>, vector<4x1xf32>
      tpu.vector_store %arg9[%c0_37, %c0_38], %81 {strides = array<i32>} : memref<4x1xf32, #tpu.memory_space<vmem>>, vector<4x1xf32>,
    } else {
    }
    %c0 = arith.constant 0 : index
    %c0_3 = arith.constant 0 : index
    %c0_4 = arith.constant 0 : index
    %8 = vector.load %arg2[%c0, %c0_3, %c0_4] : memref<1x4x256xf32, #tpu.memory_space<vmem>>, vector<1x4x256xf32>
    %9 = vector.shape_cast %8 : vector<1x4x256xf32> to vector<4x256xf32>
    %c0_5 = arith.constant 0 : index
    %c0_6 = arith.constant 0 : index
    %c0_7 = arith.constant 0 : index
    %10 = vector.load %arg3[%c0_5, %c0_6, %c0_7] : memref<1x1x256xi32, #tpu.memory_space<vmem>>, vector<1x1x256xi32>
    %11 = vector.shape_cast %10 : vector<1x1x256xi32> to vector<1x256xi32>
    %12 = tpu.iota {dimensions = array<i32: 1>} : vector<1x256xi32>
    %c256_i32 = arith.constant 256 : i32
    %13 = arith.muli %arg1, %c256_i32 : i32
    %14 = vector.broadcast %13 : i32 to vector<1x256xi32>
    %15 = arith.addi %12, %14 : vector<1x256xi32>
    %c256_i32_8 = arith.constant 256 : i32
    %16 = vector.broadcast %c256_i32_8 : i32 to vector<1x256xi32>
    %17 = arith.cmpi slt, %15, %16 : vector<1x256xi32>
    %18 = tpu.iota {dimensions = array<i32: 0>} : vector<4x256xi32>
    %19 = vector.broadcast %11 : vector<1x256xi32> to vector<4x256xi32>
    %20 = arith.cmpi eq, %18, %19 : vector<4x256xi32>
    %cst = arith.constant dense<0xFF800000> : vector<256xf32>
    %21 = vector.multi_reduction <maximumf>, %9, %cst [0] : vector<4x256xf32> to vector<256xf32>
    %22 = vector.shape_cast %21 : vector<256xf32> to vector<1x256xf32>
    %23 = vector.broadcast %22 : vector<1x256xf32> to vector<4x256xf32>
    %24 = arith.subf %9, %23 : vector<4x256xf32>
    %25 = math.exp %24 : vector<4x256xf32>
    %cst_9 = arith.constant dense<0.000000e+00> : vector<256xf32>
    %26 = vector.multi_reduction <add>, %25, %cst_9 [0] : vector<4x256xf32> to vector<256xf32>
    %27 = vector.shape_cast %26 : vector<256xf32> to vector<1x256xf32>
    %28 = math.log %27 : vector<1x256xf32>
    %29 = arith.addf %22, %28 : vector<1x256xf32>
    %cst_10 = arith.constant 0.000000e+00 : f32
    %30 = vector.broadcast %cst_10 : f32 to vector<4x256xf32>
    %31 = arith.select %20, %9, %30 : vector<4x256xi1>, vector<4x256xf32>
    %cst_11 = arith.constant dense<0.000000e+00> : vector<256xf32>
    %32 = vector.multi_reduction <add>, %31, %cst_11 [0] : vector<4x256xf32> to vector<256xf32>
    %33 = vector.shape_cast %32 : vector<256xf32> to vector<1x256xf32>
    %34 = arith.subf %29, %33 : vector<1x256xf32>
    %cst_12 = arith.constant 0.000000e+00 : f32
    %35 = vector.broadcast %cst_12 : f32 to vector<1x256xf32>
    %36 = arith.select %17, %34, %35 : vector<1x256xi1>, vector<1x256xf32>
    %c0_13 = arith.constant 0 : index
    %c0_14 = arith.constant 0 : index
    %37 = vector.load %arg7[%c0_13, %c0_14] : memref<1x1xf32, #tpu.memory_space<vmem>>, vector<1x1xf32>
    %cst_15 = arith.constant dense<0.000000e+00> : vector<1xf32>
    %38 = vector.multi_reduction <add>, %36, %cst_15 [1] : vector<1x256xf32> to vector<1xf32>
    %39 = vector.shape_cast %38 : vector<1xf32> to vector<1x1xf32>
    %40 = arith.addf %37, %39 : vector<1x1xf32>
    %c0_16 = arith.constant 0 : index
    %c0_17 = arith.constant 0 : index
    %41 = vector.load %arg7[%c0_16, %c0_17] : memref<1x1xf32, #tpu.memory_space<vmem>>, vector<1x1xf32>
    tpu.vector_store %arg7[%c0_16, %c0_17], %40 {strides = array<i32>} : memref<1x1xf32, #tpu.memory_space<vmem>>, vector<1x1xf32>,
    %42 = vector.broadcast %22 : vector<1x256xf32> to vector<4x256xf32>
    %43 = arith.cmpf oeq, %9, %42 : vector<4x256xf32>
    %c4_i32 = arith.constant 4 : i32
    %44 = vector.broadcast %c4_i32 : i32 to vector<4x256xi32>
    %45 = arith.select %43, %18, %44 : vector<4x256xi1>, vector<4x256xi32>
    %cst_18 = arith.constant dense<2147483647> : vector<256xi32>
    %46 = vector.multi_reduction <minsi>, %45, %cst_18 [0] : vector<4x256xi32> to vector<256xi32>
    %47 = vector.shape_cast %46 : vector<256xi32> to vector<1x256xi32>
    %48 = arith.cmpi eq, %47, %11 : vector<1x256xi32>
    %49 = arith.andi %48, %17 : vector<1x256xi1>
    %50 = vector.broadcast %49 : vector<1x256xi1> to vector<4x256xi1>
    %51 = arith.andi %20, %50 : vector<4x256xi1>
    %52 = arith.extui %51 : vector<4x256xi1> to vector<4x256xi32>
    %53 = arith.sitofp %52 : vector<4x256xi32> to vector<4x256xf32>
    %54 = vector.broadcast %17 : vector<1x256xi1> to vector<4x256xi1>
    %55 = arith.andi %20, %54 : vector<4x256xi1>
    %56 = arith.extui %55 : vector<4x256xi1> to vector<4x256xi32>
    %57 = arith.sitofp %56 : vector<4x256xi32> to vector<4x256xf32>
    %58 = vector.broadcast %47 : vector<1x256xi32> to vector<4x256xi32>
    %59 = arith.cmpi eq, %18, %58 : vector<4x256xi32>
    %60 = vector.broadcast %17 : vector<1x256xi1> to vector<4x256xi1>
    %61 = arith.andi %59, %60 : vector<4x256xi1>
    %62 = arith.extui %61 : vector<4x256xi1> to vector<4x256xi32>
    %63 = arith.sitofp %62 : vector<4x256xi32> to vector<4x256xf32>
    %c0_19 = arith.constant 0 : index
    %c0_20 = arith.constant 0 : index
    %64 = vector.load %arg8[%c0_19, %c0_20] : memref<4x1xf32, #tpu.memory_space<vmem>>, vector<4x1xf32>
    %cst_21 = arith.constant dense<0.000000e+00> : vector<4xf32>
    %65 = vector.multi_reduction <add>, %53, %cst_21 [1] : vector<4x256xf32> to vector<4xf32>
    %66 = vector.shape_cast %65 : vector<4xf32> to vector<4x1xf32>
    %67 = arith.addf %64, %66 : vector<4x1xf32>
    %c0_22 = arith.constant 0 : index
    %c0_23 = arith.constant 0 : index
    %68 = vector.load %arg8[%c0_22, %c0_23] : memref<4x1xf32, #tpu.memory_space<vmem>>, vector<4x1xf32>
    tpu.vector_store %arg8[%c0_22, %c0_23], %67 {strides = array<i32>} : memref<4x1xf32, #tpu.memory_space<vmem>>, vector<4x1xf32>,
    %c0_24 = arith.constant 0 : index
    %c0_25 = arith.constant 0 : index
    %69 = vector.load %arg9[%c0_24, %c0_25] : memref<4x1xf32, #tpu.memory_space<vmem>>, vector<4x1xf32>
    %70 = arith.addf %63, %57 : vector<4x256xf32>
    %cst_26 = arith.constant dense<0.000000e+00> : vector<4xf32>
    %71 = vector.multi_reduction <add>, %70, %cst_26 [1] : vector<4x256xf32> to vector<4xf32>
    %72 = vector.shape_cast %71 : vector<4xf32> to vector<4x1xf32>
    %73 = arith.addf %69, %72 : vector<4x1xf32>
    %c0_27 = arith.constant 0 : index
    %c0_28 = arith.constant 0 : index
    %74 = vector.load %arg9[%c0_27, %c0_28] : memref<4x1xf32, #tpu.memory_space<vmem>>, vector<4x1xf32>
    tpu.vector_store %arg9[%c0_27, %c0_28], %73 {strides = array<i32>} : memref<4x1xf32, #tpu.memory_space<vmem>>, vector<4x1xf32>,
    %75 = arith.extui %5 : i1 to i32
    %c0_i32_29 = arith.constant 0 : i32
    %76 = arith.cmpi ne, %75, %c0_i32_29 : i32
    scf.if %76 {
      %c0_30 = arith.constant 0 : index
      %c0_31 = arith.constant 0 : index
      %77 = vector.load %arg7[%c0_30, %c0_31] : memref<1x1xf32, #tpu.memory_space<vmem>>, vector<1x1xf32>
      %cst_32 = arith.constant 5.120000e+02 : f32
      %78 = vector.broadcast %cst_32 : f32 to vector<1x1xf32>
      %79 = arith.divf %77, %78 : vector<1x1xf32>
      %c0_33 = arith.constant 0 : index
      %c0_34 = arith.constant 0 : index
      %80 = vector.load %arg8[%c0_33, %c0_34] : memref<4x1xf32, #tpu.memory_space<vmem>>, vector<4x1xf32>
      %c0_35 = arith.constant 0 : index
      %c0_36 = arith.constant 0 : index
      %81 = vector.load %arg9[%c0_35, %c0_36] : memref<4x1xf32, #tpu.memory_space<vmem>>, vector<4x1xf32>
      %cst_37 = arith.constant 0.000000e+00 : f32
      %82 = vector.broadcast %cst_37 : f32 to vector<4x1xf32>
      %83 = arith.cmpf ogt, %81, %82 : vector<4x1xf32>
      %cst_38 = arith.constant 2.000000e+00 : f32
      %84 = vector.broadcast %cst_38 : f32 to vector<4x1xf32>
      %85 = arith.mulf %84, %80 : vector<4x1xf32>
      %cst_39 = arith.constant 1.000000e+00 : f32
      %86 = vector.broadcast %cst_39 : f32 to vector<4x1xf32>
      %87 = arith.select %83, %81, %86 : vector<4x1xi1>, vector<4x1xf32>
      %88 = arith.divf %85, %87 : vector<4x1xf32>
      %cst_40 = arith.constant 0.000000e+00 : f32
      %89 = vector.broadcast %cst_40 : f32 to vector<4x1xf32>
      %90 = arith.select %83, %88, %89 : vector<4x1xi1>, vector<4x1xf32>
      %91 = arith.extui %83 : vector<4x1xi1> to vector<4x1xi32>
      %92 = arith.sitofp %91 : vector<4x1xi32> to vector<4x1xf32>
      %93 = vector.shape_cast %92 : vector<4x1xf32> to vector<1x4x1xf32>
      %cst_41 = arith.constant dense<0.000000e+00> : vector<1xf32>
      %94 = vector.multi_reduction <add>, %93, %cst_41 [1, 2] : vector<1x4x1xf32> to vector<1xf32>
      %95 = vector.shape_cast %94 : vector<1xf32> to vector<1x1x1xf32>
      %96 = vector.extract %95[0, 0, 0] : f32 from vector<1x1x1xf32>
      %97 = vector.shape_cast %90 : vector<4x1xf32> to vector<1x4x1xf32>
      %cst_42 = arith.constant dense<0.000000e+00> : vector<1xf32>
      %98 = vector.multi_reduction <add>, %97, %cst_42 [1, 2] : vector<1x4x1xf32> to vector<1xf32>
      %99 = vector.shape_cast %98 : vector<1xf32> to vector<1x1x1xf32>
      %100 = vector.extract %99[0, 0, 0] : f32 from vector<1x1x1xf32>
      %cst_43 = arith.constant 1.000000e+00 : f32
      %101 = arith.maximumf %96, %cst_43 : f32
      %102 = arith.divf %100, %101 : f32
      %cst_44 = arith.constant 1.000000e+00 : f32
      %103 = arith.subf %cst_44, %102 : f32
      %c0_45 = arith.constant 0 : index
      %c0_46 = arith.constant 0 : index
      %104 = vector.load %arg5[%c0_45, %c0_46] : memref<1x1xf32, #tpu.memory_space<vmem>>, vector<1x1xf32>
      tpu.vector_store %arg5[%c0_45, %c0_46], %79 {strides = array<i32>} : memref<1x1xf32, #tpu.memory_space<vmem>>, vector<1x1xf32>,
      %105 = vector.broadcast %103 : f32 to vector<1x1xf32>
      %c0_47 = arith.constant 0 : index
      %c0_48 = arith.constant 0 : index
      %106 = vector.load %arg6[%c0_47, %c0_48] : memref<1x1xf32, #tpu.memory_space<vmem>>, vector<1x1xf32>
      tpu.vector_store %arg6[%c0_47, %c0_48], %105 {strides = array<i32>} : memref<1x1xf32, #tpu.memory_space<vmem>>, vector<1x1xf32>,
      %cst_49 = arith.constant 5.000000e-01 : f32
      %107 = vector.broadcast %cst_49 : f32 to vector<1x1xf32>
      %108 = arith.mulf %107, %79 : vector<1x1xf32>
      %cst_50 = arith.constant 5.000000e-01 : f32
      %109 = arith.mulf %cst_50, %103 : f32
      %110 = vector.broadcast %109 : f32 to vector<1x1xf32>
      %111 = arith.addf %108, %110 : vector<1x1xf32>
      %c0_51 = arith.constant 0 : index
      %c0_52 = arith.constant 0 : index
      %112 = vector.load %arg4[%c0_51, %c0_52] : memref<1x1xf32, #tpu.memory_space<vmem>>, vector<1x1xf32>
      tpu.vector_store %arg4[%c0_51, %c0_52], %111 {strides = array<i32>} : memref<1x1xf32, #tpu.memory_space<vmem>>, vector<1x1xf32>,
    } else {
    }
    return
  }
  func.func @transform_0(%arg0: i32, %arg1: i32) -> (i32, i32, i32) {
    %c0_i32 = arith.constant 0 : i32
    %c0_i32_0 = arith.constant 0 : i32
    return %arg0, %c0_i32, %arg1 : i32, i32, i32
  }
  func.func @transform_1(%arg0: i32, %arg1: i32) -> (i32, i32, i32) {
    %c0_i32 = arith.constant 0 : i32
    %c0_i32_0 = arith.constant 0 : i32
    return %arg0, %c0_i32, %arg1 : i32, i32, i32
  }
  func.func @transform_2(%arg0: i32, %arg1: i32) -> (i32, i32) {
    %c0_i32 = arith.constant 0 : i32
    %c0_i32_0 = arith.constant 0 : i32
    %c0_i32_1 = arith.constant 0 : i32
    return %c0_i32, %c0_i32_0 : i32, i32
  }
  func.func @transform_3(%arg0: i32, %arg1: i32) -> (i32, i32) {
    %c0_i32 = arith.constant 0 : i32
    %c0_i32_0 = arith.constant 0 : i32
    %c0_i32_1 = arith.constant 0 : i32
    return %c0_i32, %c0_i32_0 : i32, i32
  }
  func.func @transform_4(%arg0: i32, %arg1: i32) -> (i32, i32) {
    %c0_i32 = arith.constant 0 : i32
    %c0_i32_0 = arith.constant 0 : i32
    %c0_i32_1 = arith.constant 0 : i32
    return %c0_i32, %c0_i32_0 : i32, i32
  }
}

</mosaic_0001>

<llo_original>
// kernel: tpu_custom_call.1
$region0: #{tpu_custom_call.1}
  #allocation0 [shape = 'u32[]', space=smem, size = 0x4, offset = 0x4, fixed_abs, tag = 'smem constant byte address 0x4 - core index']
  #allocation1 [shape = 'u32[144,128]{1,0:T(1,128)}', space=vmem, size = 0x12000, scoped, tag = 'internal scratch']
  #allocation2 [shape = 'f32[1,1]{1,0:T(1,128)}', space=vmem, size = 0x200, scoped, tag = 'scratch operand']
  #allocation3 [shape = 'f32[4,1]{1,0:T(4,128)}', space=vmem, size = 0x800, scoped, tag = 'scratch operand']
  #allocation4 [shape = 'f32[4,1]{1,0:T(4,128)}', space=vmem, size = 0x800, scoped, tag = 'scratch operand']
  %s0 = inlined_call_operand.hbm [shape: f32[2,4,256], index: 0, kind: input, shape index: {}]
  %s1 = inlined_call_operand.hbm [shape: s32[2,1,256], index: 1, kind: input, shape index: {}]
  %s2 = inlined_call_operand.hbm [shape: f32[1,1], index: 2, kind: output, shape index: {0}]
  %s3 = inlined_call_operand.hbm [shape: f32[1,1], index: 3, kind: output, shape index: {1}]
  %s4 = inlined_call_operand.hbm [shape: f32[1,1], index: 4, kind: output, shape index: {2}]
  %5 = xla_tuple %s2, %s3, %s4
  %s6 = sld [smem:[#allocation0]]
  $region73: #{tpu_custom_call.1} parent=0
    _
  %s8 = ssub.s32 1, %s6
  %s9 = scalar_select 0, %s8, %s6
  $region1: #{tpu_custom_call.1} parent=0
    #allocation5 [shape = 'u8[8192]{0}', space=vmem, size = 0x2000, scoped, tag = 'input window, operand 0']
    #allocation6 [shape = 's32[2]{0}', space=sflag, size = 0x8, scoped, tag = 'scoped memory for tpu_custom_call.1']
    #allocation7 [shape = 's32[2]{0}', space=sflag, size = 0x8, scoped, tag = 'scoped memory for tpu_custom_call.1']
    #allocation8 [shape = 'u8[2048]{0}', space=vmem, size = 0x800, scoped, tag = 'input window, operand 1']
    #allocation9 [shape = 's32[2]{0}', space=sflag, size = 0x8, scoped, tag = 'scoped memory for tpu_custom_call.1']
    #allocation10 [shape = 'u8[512]{0}', space=vmem, size = 0x400, scoped, tag = 'output window, operand 0, single buffered']
    #allocation11 [shape = 'u8[512]{0}', space=vmem, size = 0x400, scoped, tag = 'output window, operand 1, single buffered']
    #allocation12 [shape = 's32[1]{0}', space=sflag, size = 0x4, scoped, tag = 'scoped memory for tpu_custom_call.1']
    #allocation13 [shape = 'u8[512]{0}', space=vmem, size = 0x400, scoped, tag = 'output window, operand 2, single buffered']
    %10 = vsyncpa [#allocation6], 0
    %s11 = scalar_lea.sflag [#allocation6], 1
    %12 = vsyncpa %s11, 0
    %13 = vsyncpa [#allocation9], 0
    %s14 = scalar_lea.sflag [#allocation9], 1
    %15 = vsyncpa %s14, 0
    %16 = vsyncpa [#allocation7], 0
    %17 = vsyncpa [#allocation12], 0
    loop: start=0, step=1, limit=4
    $region2: #{tpu_custom_call.1} parent=1 // loop_pre_header
      _
    $region3: #{tpu_custom_call.1} parent=1 // loop_header
      %s19 = sphi 0, %s23
      %p20 = scmp.ge.s32.totalorder %s19, 4
      %s26 = sphi 0, %s38
      %s27 = sphi 0, %s34
      %s28 = sphi 0, %s26
      %s29 = sphi 0, %s27
      %s30 = sphi 0, %s28
      %s31 = sphi 0, %s29
      %s43 = sphi 0, %s45
      %s46 = sphi 0, %s43
      %s47 = sphi 0, %s46
      %s63 = sphi 0, %s47
      %s71 = sphi 0, %s73
      %s74 = sphi 0, %s71
      %s75 = sphi 0, %s74
      %s91 = sphi 0, %s75
      %s95 = sphi 0, %s95
      %s97 = sphi 0, %s95
      %s98 = sphi 0, %s97
      %s112 = sphi 0, %s98
      %s116 = sphi 0, %s116
      %s118 = sphi 0, %s116
      %s119 = sphi 0, %s118
      %s133 = sphi 0, %s119
      %s137 = sphi 0, %s137
      %s139 = sphi 0, %s137
      %s140 = sphi 0, %s139
      %s154 = sphi 0, %s140
    $region4: #{tpu_custom_call.1} parent=1 // loop_header_branch
      %22 = sbr.rel (%p20) target = $region8
    $region5: #{tpu_custom_call.1} parent=1 // loop_body
      %s24 = ssub.s32 %s19, 1
      %s25 = ssub.s32 %s19, 2
      %s32 = sadd.s32 1, %s27
      %p33 = scmp.ge.s32.totalorder %s32, 1
      %s34 = scalar_select %p33, 0, %s32
      %s35 = sadd.s32 1, %s26
      %s36 = scalar_select %p33, %s35, %s26
      %p37 = scmp.ge.s32.totalorder %s36, 2
      %s38 = scalar_select %p37, 0, %s36
      %s39 = ssub.s32 %s26, %s38
      %s40 = ssub.s32 %s27, %s34
      %s41 = sor.u32 %s39, %s40
      %p42 = scmp.eq.s32.totalorder %s41, 0
      %s44 = sadd.s32 %s43, 1
      %s45 = scalar_select %p42, %s43, %s44
      %p48 = pneg %p42
      %p49 = scmp.eq.s32.totalorder %s19, 1
      %p50 = por %p48, %p49
      %p51 = scmp.ne.s32.totalorder %s43, %s46
      %p52 = scmp.eq.s32.totalorder %s19, 0
      %p53 = por %p51, %p52
      %p54 = scmp.ne.s32.totalorder %s43, %s46
      %p55 = scmp.eq.s32.totalorder %s24, 1
      %p56 = por %p54, %p55
      %p57 = scmp.ne.s32.totalorder %s46, %s47
      %p58 = scmp.eq.s32.totalorder %s24, 0
      %p59 = por %p57, %p58
      %p60 = scmp.ne.s32.totalorder %s46, %s47
      %p61 = scmp.eq.s32.totalorder %s25, 1
      %p62 = por %p60, %p61
      %p64 = scmp.ne.s32.totalorder %s47, %s63
      %p65 = scmp.eq.s32.totalorder %s25, 0
      %p66 = por %p64, %p65
      %s67 = ssub.s32 %s26, %s38
      %s68 = ssub.s32 %s27, %s34
      %s69 = sor.u32 %s67, %s68
      %p70 = scmp.eq.s32.totalorder %s69, 0
      %s72 = sadd.s32 %s71, 1
      %s73 = scalar_select %p70, %s71, %s72
      %p76 = pneg %p70
      %p77 = scmp.eq.s32.totalorder %s19, 1
      %p78 = por %p76, %p77
      %p79 = scmp.ne.s32.totalorder %s71, %s74
      %p80 = scmp.eq.s32.totalorder %s19, 0
      %p81 = por %p79, %p80
      %p82 = scmp.ne.s32.totalorder %s71, %s74
      %p83 = scmp.eq.s32.totalorder %s24, 1
      %p84 = por %p82, %p83
      %p85 = scmp.ne.s32.totalorder %s74, %s75
      %p86 = scmp.eq.s32.totalorder %s24, 0
      %p87 = por %p85, %p86
      %p88 = scmp.ne.s32.totalorder %s74, %s75
      %p89 = scmp.eq.s32.totalorder %s25, 1
      %p90 = por %p88, %p89
      %p92 = scmp.ne.s32.totalorder %s75, %s91
      %p93 = scmp.eq.s32.totalorder %s25, 0
      %p94 = por %p92, %p93
      %s96 = sadd.s32 %s95, 1
      %p99 = scmp.eq.s32.totalorder %s19, 1
      %p100 = scmp.ne.s32.totalorder %s95, %s97
      %p101 = scmp.eq.s32.totalorder %s19, 0
      %p102 = por %p100, %p101
      %p103 = scmp.ne.s32.totalorder %s95, %s97
      %p104 = scmp.eq.s32.totalorder %s24, 1
      %p105 = por %p103, %p104
      %p106 = scmp.ne.s32.totalorder %s97, %s98
      %p107 = scmp.eq.s32.totalorder %s24, 0
      %p108 = por %p106, %p107
      %p109 = scmp.ne.s32.totalorder %s97, %s98
      %p110 = scmp.eq.s32.totalorder %s25, 1
      %p111 = por %p109, %p110
      %p113 = scmp.ne.s32.totalorder %s98, %s112
      %p114 = scmp.eq.s32.totalorder %s25, 0
      %p115 = por %p113, %p114
      %s117 = sadd.s32 %s116, 1
      %p120 = scmp.eq.s32.totalorder %s19, 1
      %p121 = scmp.ne.s32.totalorder %s116, %s118
      %p122 = scmp.eq.s32.totalorder %s19, 0
      %p123 = por %p121, %p122
      %p124 = scmp.ne.s32.totalorder %s116, %s118
      %p125 = scmp.eq.s32.totalorder %s24, 1
      %p126 = por %p124, %p125
      %p127 = scmp.ne.s32.totalorder %s118, %s119
      %p128 = scmp.eq.s32.totalorder %s24, 0
      %p129 = por %p127, %p128
      %p130 = scmp.ne.s32.totalorder %s118, %s119
      %p131 = scmp.eq.s32.totalorder %s25, 1
      %p132 = por %p130, %p131
      %p134 = scmp.ne.s32.totalorder %s119, %s133
      %p135 = scmp.eq.s32.totalorder %s25, 0
      %p136 = por %p134, %p135
      %s138 = sadd.s32 %s137, 1
      %p141 = scmp.eq.s32.totalorder %s19, 1
      %p142 = scmp.ne.s32.totalorder %s137, %s139
      %p143 = scmp.eq.s32.totalorder %s19, 0
      %p144 = por %p142, %p143
      %p145 = scmp.ne.s32.totalorder %s137, %s139
      %p146 = scmp.eq.s32.totalorder %s24, 1
      %p147 = por %p145, %p146
      %p148 = scmp.ne.s32.totalorder %s139, %s140
      %p149 = scmp.eq.s32.totalorder %s24, 0
      %p150 = por %p148, %p149
      %p151 = scmp.ne.s32.totalorder %s139, %s140
      %p152 = scmp.eq.s32.totalorder %s25, 1
      %p153 = por %p151, %p152
      %p155 = scmp.ne.s32.totalorder %s140, %s154
      %p156 = scmp.eq.s32.totalorder %s25, 0
      %p157 = por %p155, %p156
      %p158 = scmp.le.s32.totalorder 1, %s19
      %p159 = scmp.lt.s32.totalorder %s19, 3
      %p160 = pnand %p158, %p159
      %p161 = pneg %p160
      // Predicated region
      $region9: #{tpu_custom_call.1} parent=5 // pred_check
        _
      $region10: #{tpu_custom_call.1} parent=5 // pred_check_branch
        %163 = sbr.rel (%p160) target = $region12
      $region11: #{tpu_custom_call.1} parent=5 // pred_region
        %s164 = ssub.s32 %s19, 1
      $region12: #{tpu_custom_call.1} parent=5 // pred_fallthru
        _
      %p165 = scmp.lt.s32.totalorder %s19, 2
      // Predicated region
      $region13: #{tpu_custom_call.1} parent=5 // pred_check
        %p166 = pneg %p165
      $region14: #{tpu_custom_call.1} parent=5 // pred_check_branch
        %168 = sbr.rel (%p166) target = $region16
      $region15: #{tpu_custom_call.1} parent=5 // pred_region
        // Predicated region
        $region17: #{tpu_custom_call.1} parent=15 // pred_check
          %p169 = pneg %p53
        $region18: #{tpu_custom_call.1} parent=15 // pred_check_branch
          %171 = sbr.rel (%p169) target = $region20
        $region19: #{tpu_custom_call.1} parent=15 // pred_region
          %s172 = sand.u32 %s43, 1
          %s173 = scalar_lea.sflag [#allocation6], %s172
          %s174 = sand.u32 %s43, 1
          %s175 = smul.addr %s174, 8
          %s176 = scalar_lea.vmem [#allocation5], %s175
          %s177 = smul.u32 2, %s27
          %s179 = ssub.s32 128, 128
          %180 = vsyncadd %s173, %s179
          %s181 = smul.addr %s26, 2
          %s182 = sadd.s32 %s177, %s181
          %s183 = smul.addr %s182, 64
          %s184 = scalar_lea.hbm %s0, %s183
          %s186 = sshll.u32 %s176, 4
          %s187 = int_to_ptr.vmem [resolvable:$true] %s186
          %189 = dma.hbm_to_vmem [thread:$0]  %s184, 128, %s187, %s173
        $region20: #{tpu_custom_call.1} parent=15 // pred_fallthru
          _
        // Predicated region
        $region21: #{tpu_custom_call.1} parent=15 // pred_check
          %p190 = pneg %p81
        $region22: #{tpu_custom_call.1} parent=15 // pred_check_branch
          %192 = sbr.rel (%p190) target = $region24
        $region23: #{tpu_custom_call.1} parent=15 // pred_region
          %s193 = sand.u32 %s71, 1
          %s194 = scalar_lea.sflag [#allocation9], %s193
          %s195 = sand.u32 %s71, 1
          %s196 = smul.addr %s195, 2
          %s197 = scalar_lea.vmem [#allocation8], %s196
          %s198 = smul.u32 2, %s27
          %s200 = ssub.s32 32, 32
          %201 = vsyncadd %s194, %s200
          %s202 = smul.addr %s26, 2
          %s203 = sadd.s32 %s198, %s202
          %s204 = smul.addr %s203, 16
          %s205 = scalar_lea.hbm %s1, %s204
          %s207 = sshll.u32 %s197, 4
          %s208 = int_to_ptr.vmem [resolvable:$true] %s207
          %210 = dma.hbm_to_vmem [thread:$0]  %s205, 32, %s208, %s194
        $region24: #{tpu_custom_call.1} parent=15 // pred_fallthru
          _
      $region16: #{tpu_custom_call.1} parent=5 // pred_fallthru
        _
      %p211 = scmp.le.s32.totalorder 1, %s19
      %p212 = scmp.lt.s32.totalorder %s19, 3
      %p213 = pnand %p211, %p212
      %p214 = pneg %p213
      // Predicated region
      $region25: #{tpu_custom_call.1} parent=5 // pred_check
        _
      $region26: #{tpu_custom_call.1} parent=5 // pred_check_branch
        %216 = sbr.rel (%p213) target = $region28
      $region27: #{tpu_custom_call.1} parent=5 // pred_region
        %s217 = ssub.s32 %s19, 1
        %s218 = sand.u32 %s46, 1
        %s219 = scalar_lea.sflag [#allocation6], %s218
        %s220 = sand.u32 %s46, 1
        %s221 = smul.addr %s220, 8
        %s222 = scalar_lea.vmem [#allocation5], %s221
        // Predicated region
        $region29: #{tpu_custom_call.1} parent=27 // pred_check
          %p223 = pneg %p59
        $region30: #{tpu_custom_call.1} parent=27 // pred_check_branch
          %225 = sbr.rel (%p223) target = $region32
        $region31: #{tpu_custom_call.1} parent=27 // pred_region
          %226 = dma.done %s219, 128
        $region32: #{tpu_custom_call.1} parent=27 // pred_fallthru
          _
        %s227 = sand.u32 %s74, 1
        %s228 = scalar_lea.sflag [#allocation9], %s227
        %s229 = sand.u32 %s74, 1
        %s230 = smul.addr %s229, 2
        %s231 = scalar_lea.vmem [#allocation8], %s230
        // Predicated region
        $region33: #{tpu_custom_call.1} parent=27 // pred_check
          %p232 = pneg %p87
        $region34: #{tpu_custom_call.1} parent=27 // pred_check_branch
          %234 = sbr.rel (%p232) target = $region36
        $region35: #{tpu_custom_call.1} parent=27 // pred_region
          %235 = dma.done %s228, 32
        $region36: #{tpu_custom_call.1} parent=27 // pred_fallthru
          _
        %s236 = sand.u32 %s46, 1
        %s237 = scalar_lea.sflag [#allocation6], %s236
        %s238 = sand.u32 %s46, 1
        %s239 = smul.addr %s238, 8
        %s240 = scalar_lea.vmem [#allocation5], %s239
        %p241 = pneg %p59
        %p242 = pneg %p56
        %s243 = sand.u32 %s74, 1
        %s244 = scalar_lea.sflag [#allocation9], %s243
        %s245 = sand.u32 %s74, 1
        %s246 = smul.addr %s245, 2
        %s247 = scalar_lea.vmem [#allocation8], %s246
        %p248 = pneg %p87
        %p249 = pneg %p84
        %p250 = pneg %p108
        %p251 = pneg %p105
        %p252 = pneg %p129
        %p253 = pneg %p126
        %p254 = pneg %p150
        %p255 = pneg %p147
        %s256 = smul.u32 2, %s29
        %s257 = smul.u32 2, %s29
        %p258 = scmp.eq.s32.totalorder %s28, 0
        %p259 = scmp.eq.s32.totalorder %s29, 0
        %p260 = pnand %p258, %p259
        %p261 = pneg %p260
        %p262 = scmp.eq.s32.totalorder %s28, 1
        %p263 = pnand %p262, %p259
        %p264 = pneg %p263
        // Predicated region
        $region37: #{tpu_custom_call.1} parent=27 // pred_check
          _
        $region38: #{tpu_custom_call.1} parent=27 // pred_check_branch
          %266 = sbr.rel (%p260) target = $region40
        $region39: #{tpu_custom_call.1} parent=27 // pred_region
          %vm267 = vcmask 0
          %268 = vst.msk [vmem:[#allocation2] sm:$0x1] %vm267, 0.0
          %vm269 = vcmask 3072
          %270 = vst.msk [vmem:[#allocation3] sm:$0xf] %vm269, 0.0
          %271 = vst.msk [vmem:[#allocation4] sm:$0xf] %vm269, 0.0
        $region40: #{tpu_custom_call.1} parent=27 // pred_fallthru
          _
        %v272 = vld [vmem:[%s222] sm:$0xff]
        %v273 = vld [vmem:[%s231] sm:$0x3]
        %v274 = vlaneseq
        %v275 = vand.u32 %v274, 127
        %v276 = vadd.s32 %v275, 128
        %s277 = smul.u32 %s29, 256
        %v278 = vstv %s277
        %v279 = vadd.s32 %v275, %v278
        %v280 = vadd.s32 %v276, %v278
        %vm281 = vcmp.lt.s32.totalorder %v279, 256
        %vm282 = vcmp.lt.s32.totalorder %v280, 256
        %v283 = vlaneseq
        %v284 = vshrl.u32 %v283, 7
        %v285 = vlaneseq
        %v286 = vshrl.u32 %v285, 7
        %v287 = vsub.s32 0, %v286
        %v288 = vrot.slane %v273, %v287
        %v289 = vlaneseq
        %v290 = vshrl.u32 %v289, 7
        %v291 = vsub.s32 1, %v290
        %v292 = vrot.slane %v273, %v291
        %vm293 = vcmp.eq.s32.totalorder %v284, %v288
        %vm294 = vcmp.eq.s32.totalorder %v284, %v292
        %v296 = vcombine.high %v272, %v272
        %vm298 = vcmask 1043456
        %v299 = vsel %vm298, %v272, -inf
        %v300 = vrot.slane %v299, 4
        %v301 = vmax.f32 %v299, %v300
        %v302 = vrot.slane %v301, 2
        %v303 = vmax.f32 %v301, %v302
        %v304 = vrot.slane %v303, 1
        %v305 = vmax.f32 %v303, %v304
        %v306 = vsel %vm298, %v296, -inf
        %v307 = vrot.slane %v306, 4
        %v308 = vmax.f32 %v306, %v307
        %v309 = vrot.slane %v308, 2
        %v310 = vmax.f32 %v308, %v309
        %v311 = vrot.slane %v310, 1
        %v312 = vmax.f32 %v310, %v311
        %v315 = vcombine.low %v305, %v312
        %v317 = vsub.f32 %v272, %v315
        %v318 = vmul.f32 %v317, 1.442695
        %v319 = vpow.pop %v318
        %v321 = vcombine.high %v319, %v319
        %v323 = vsel %vm298, %v319, 0.0
        %v324 = vrot.slane %v323, 4
        %v325 = vadd.f32 %v323, %v324
        %v326 = vrot.slane %v325, 2
        %v327 = vadd.f32 %v325, %v326
        %v328 = vrot.slane %v327, 1
        %v329 = vadd.f32 %v327, %v328
        %v330 = vsel %vm298, %v321, 0.0
        %v331 = vrot.slane %v330, 4
        %v332 = vadd.f32 %v330, %v331
        %v333 = vrot.slane %v332, 2
        %v334 = vadd.f32 %v332, %v333
        %v335 = vrot.slane %v334, 1
        %v336 = vadd.f32 %v334, %v335
        %v337 = vlog2.pop %v329
        %v338 = vmul.f32 %v337, 0.6931472
        %v339 = vlog2.pop %v336
        %v340 = vmul.f32 %v339, 0.6931472
        %v341 = vadd.f32 %v305, %v338
        %v342 = vadd.f32 %v312, %v340
        %v343 = vsel %vm293, %v272, 0.0
        %v344 = vsel %vm294, %v296, 0.0
        %v345 = vsel %vm298, %v343, 0.0
        %v346 = vrot.slane %v345, 4
        %v347 = vadd.f32 %v345, %v346
        %v348 = vrot.slane %v347, 2
        %v349 = vadd.f32 %v347, %v348
        %v350 = vrot.slane %v349, 1
        %v351 = vadd.f32 %v349, %v350
        %v352 = vsel %vm298, %v344, 0.0
        %v353 = vrot.slane %v352, 4
        %v354 = vadd.f32 %v352, %v353
        %v355 = vrot.slane %v354, 2
        %v356 = vadd.f32 %v354, %v355
        %v357 = vrot.slane %v356, 1
        %v358 = vadd.f32 %v356, %v357
        %v359 = vsub.f32 %v341, %v351
        %v360 = vsub.f32 %v342, %v358
        %v361 = vsel %vm281, %v359, 0.0
        %v362 = vsel %vm282, %v360, 0.0
        %v363 = vld [vmem:[#allocation2] sm:$0x1]
        %v364 = vadd.f32 %v361, %v362
        %365 = vadd.xlane.f32.xlu0 %v364
        %v366 = vpop.xlane.xlu0 %365
        %v367 = vadd.f32 %v363, %v366
        %vm368 = vcmask 0
        %369 = vst.msk [vmem:[#allocation2] sm:$0x1] %vm368, %v367
        %vm370 = vcmp.eq.f32.partialorder %v272, %v315
        %v372 = vunpack.c.l.s4 839922192
        %v373 = vunpack.c.0.s8 %v372
        %v374 = vlaneseq
        %v375 = vshrl.u32 %v374, 7
        %v376 = vsub.s32 %v373, %v375
        %v377 = vrot.slane %v284, %v376
        %v378 = vsel %vm370, %v377, 4
        %v379 = vcombine.high %v378, %v378
        %v380 = vsel %vm298, %v378, 2147483647
        %v381 = vrot.slane %v380, 4
        %vm382 = vcmp.lt.s32.totalorder %v380, %v381
        %v383 = vsel %vm382, %v380, %v381
        %v384 = vrot.slane %v383, 2
        %vm385 = vcmp.lt.s32.totalorder %v383, %v384
        %v386 = vsel %vm385, %v383, %v384
        %v387 = vrot.slane %v386, 1
        %vm388 = vcmp.lt.s32.totalorder %v386, %v387
        %v389 = vsel %vm388, %v386, %v387
        %v390 = vsel %vm298, %v379, 2147483647
        %v391 = vrot.slane %v390, 4
        %vm392 = vcmp.lt.s32.totalorder %v390, %v391
        %v393 = vsel %vm392, %v390, %v391
        %v394 = vrot.slane %v393, 2
        %vm395 = vcmp.lt.s32.totalorder %v393, %v394
        %v396 = vsel %vm395, %v393, %v394
        %v397 = vrot.slane %v396, 1
        %vm398 = vcmp.lt.s32.totalorder %v396, %v397
        %v399 = vsel %vm398, %v396, %v397
        %vm400 = vcmp.eq.s32.totalorder %v389, %v288
        %vm401 = vcmp.eq.s32.totalorder %v399, %v292
        %vm402 = vmand %vm400, %vm281
        %vm403 = vmand %vm401, %vm282
        %v404 = vsel %vm402, 1, 0
        %v405 = vsel %vm403, 1, 0
        %v406 = vlaneseq
        %v407 = vshrl.u32 %v406, 7
        %v408 = vsub.s32 0, %v407
        %v409 = vrot.slane %v404, %v408
        %v410 = vlaneseq
        %v411 = vshrl.u32 %v410, 7
        %v412 = vsub.s32 0, %v411
        %v413 = vrot.slane %v405, %v412
        %vm414 = vcmp.eq.s32.totalorder %v409, 1
        %vm415 = vcmp.eq.s32.totalorder %v413, 1
        %vm416 = vmand %vm293, %vm414
        %vm417 = vmand %vm294, %vm415
        %v418 = vsel %vm416, 1, 0
        %v419 = vsel %vm417, 1, 0
        %v420 = vcvt.s32.f32 %v418
        %v421 = vcvt.s32.f32 %v419
        %v422 = vsel %vm281, 1, 0
        %v423 = vsel %vm282, 1, 0
        %vm424 = vcmp.eq.s32.totalorder %v422, 1
        %vm425 = vcmp.eq.s32.totalorder %v423, 1
        %vm426 = vmand %vm293, %vm424
        %vm427 = vmand %vm294, %vm425
        %v428 = vsel %vm426, 1, 0
        %v429 = vsel %vm427, 1, 0
        %v430 = vcvt.s32.f32 %v428
        %v431 = vcvt.s32.f32 %v429
        %vm432 = vcmp.eq.s32.totalorder %v284, %v389
        %vm433 = vcmp.eq.s32.totalorder %v284, %v399
        %vm434 = vmand %vm432, %vm424
        %vm435 = vmand %vm433, %vm425
        %v436 = vsel %vm434, 1, 0
        %v437 = vsel %vm435, 1, 0
        %v438 = vcvt.s32.f32 %v436
        %v439 = vcvt.s32.f32 %v437
        %v440 = vld [vmem:[#allocation3] sm:$0xf]
        %v441 = vsel %vm298, %v420, 0.0
        %v442 = vsel %vm298, %v421, 0.0
        %v443 = vadd.f32 %v441, %v442
        %444 = vadd.xlane.f32.xlu0 %v443
        %v445 = vpop.xlane.xlu0 %444
        %v446 = vadd.f32 %v440, %v445
        %vm447 = vcmask 3072
        %448 = vst.msk [vmem:[#allocation3] sm:$0xf] %vm447, %v446
        %v449 = vld [vmem:[#allocation4] sm:$0xf]
        %v450 = vadd.f32 %v438, %v430
        %v451 = vadd.f32 %v439, %v431
        %v452 = vsel %vm298, %v450, 0.0
        %v453 = vsel %vm298, %v451, 0.0
        %v454 = vadd.f32 %v452, %v453
        %455 = vadd.xlane.f32.xlu0 %v454
        %v456 = vpop.xlane.xlu0 %455
        %v457 = vadd.f32 %v449, %v456
        %458 = vst.msk [vmem:[#allocation4] sm:$0xf] %vm447, %v457
        // Predicated region
        $region41: #{tpu_custom_call.1} parent=27 // pred_check
          _
        $region42: #{tpu_custom_call.1} parent=27 // pred_check_branch
          %460 = sbr.rel (%p263) target = $region44
        $region43: #{tpu_custom_call.1} parent=27 // pred_region
          %v461 = vld [vmem:[#allocation2] sm:$0x1]
          %v462 = vrcp.pop 512.0
          %v463 = vmul.f32 %v461, %v462
          %v464 = vld [vmem:[#allocation3] sm:$0xf]
          %v465 = vld [vmem:[#allocation4] sm:$0xf]
          %vm466 = vcmp.gt.f32.partialorder %v465, 0.0
          %v467 = vmul.f32 %v464, 2.0
          %v468 = vsel %vm466, %v465, 1.0
          %v469 = vrcp.pop %v468
          %v470 = vmul.f32 %v467, %v469
          %v471 = vsel %vm466, %v470, 0.0
          %v472 = vsel %vm466, 1, 0
          %v473 = vcvt.s32.f32 %v472
          %v474 = vsel %vm447, %v473, 0.0
          %475 = vadd.xlane.f32.xlu0 %v474
          %v476 = vpop.xlane.xlu0 %475
          %v477 = vrot.slane %v476, 4
          %v478 = vadd.f32 %v476, %v477
          %v479 = vrot.slane %v478, 2
          %v480 = vadd.f32 %v478, %v479
          %v481 = vrot.slane %v480, 1
          %v482 = vadd.f32 %v480, %v481
          %s483 = vtos %v482
          %v484 = vsel %vm447, %v471, 0.0
          %485 = vadd.xlane.f32.xlu0 %v484
          %v486 = vpop.xlane.xlu0 %485
          %v487 = vrot.slane %v486, 4
          %v488 = vadd.f32 %v486, %v487
          %v489 = vrot.slane %v488, 2
          %v490 = vadd.f32 %v488, %v489
          %v491 = vrot.slane %v490, 1
          %v492 = vadd.f32 %v490, %v491
          %s493 = vtos %v492
          %s494 = smax.f32 %s483, 1.0
          %v495 = vstv %s494
          %v496 = vrcp.pop %v495
          %s497 = vtos %v496
          %s498 = smul.f32 %s493, %s497
          %s499 = ssub.f32 1.0, %s498
          %500 = vst.msk [vmem:[#allocation11] sm:$0x1] %vm368, %v463
          %v501 = vstv %s499
          %502 = vst.msk [vmem:[#allocation13] sm:$0x1] %vm368, %v501
          %v503 = vmul.f32 %v463, 0.5
          %s504 = smul.f32 %s499, 0.5
          %v505 = vstv %s504
          %v506 = vadd.f32 %v503, %v505
          %507 = vst.msk [vmem:[#allocation10] sm:$0x1] %vm368, %v506
        $region44: #{tpu_custom_call.1} parent=27 // pred_fallthru
          _
        // Predicated region
        $region45: #{tpu_custom_call.1} parent=27 // pred_check
          %p508 = pneg %p105
        $region46: #{tpu_custom_call.1} parent=27 // pred_check_branch
          %510 = sbr.rel (%p508) target = $region48
        $region47: #{tpu_custom_call.1} parent=27 // pred_region
          %s512 = ssub.s32 16, 16
          %513 = vsyncadd [#allocation7], %s512
          %s515 = sshll.u32 [#allocation10], 4
          %s516 = int_to_ptr.vmem [resolvable:$true] %s515
          %518 = dma.vmem_to_hbm [thread:$0]  %s516, 16, %s2, [#allocation7]
        $region48: #{tpu_custom_call.1} parent=27 // pred_fallthru
          _
        // Predicated region
        $region49: #{tpu_custom_call.1} parent=27 // pred_check
          %p519 = pneg %p126
        $region50: #{tpu_custom_call.1} parent=27 // pred_check_branch
          %521 = sbr.rel (%p519) target = $region52
        $region51: #{tpu_custom_call.1} parent=27 // pred_region
          %s523 = ssub.s32 16, 16
          %524 = vsyncadd [#allocation12], %s523
          %s526 = sshll.u32 [#allocation11], 4
          %s527 = int_to_ptr.vmem [resolvable:$true] %s526
          %529 = dma.vmem_to_hbm [thread:$0]  %s527, 16, %s3, [#allocation12]
        $region52: #{tpu_custom_call.1} parent=27 // pred_fallthru
          _
        // Predicated region
        $region53: #{tpu_custom_call.1} parent=27 // pred_check
          %p530 = pneg %p147
        $region54: #{tpu_custom_call.1} parent=27 // pred_check_branch
          %532 = sbr.rel (%p530) target = $region56
        $region55: #{tpu_custom_call.1} parent=27 // pred_region
          %s534 = ssub.s32 16, 16
          %535 = vsyncadd [#allocation12], %s534
          %s537 = sshll.u32 [#allocation13], 4
          %s538 = int_to_ptr.vmem [resolvable:$true] %s537
          %540 = dma.vmem_to_hbm [thread:$0]  %s538, 16, %s4, [#allocation12]
        $region56: #{tpu_custom_call.1} parent=27 // pred_fallthru
          _
        // Predicated region
        $region57: #{tpu_custom_call.1} parent=27 // pred_check
          %p541 = pneg %p105
        $region58: #{tpu_custom_call.1} parent=27 // pred_check_branch
          %543 = sbr.rel (%p541) target = $region60
        $region59: #{tpu_custom_call.1} parent=27 // pred_region
          %544 = dma.done [#allocation7], 16
        $region60: #{tpu_custom_call.1} parent=27 // pred_fallthru
          _
        // Predicated region
        $region61: #{tpu_custom_call.1} parent=27 // pred_check
          %p545 = pneg %p126
        $region62: #{tpu_custom_call.1} parent=27 // pred_check_branch
          %547 = sbr.rel (%p545) target = $region64
        $region63: #{tpu_custom_call.1} parent=27 // pred_region
          %548 = dma.done [#allocation12], 16
        $region64: #{tpu_custom_call.1} parent=27 // pred_fallthru
          _
        // Predicated region
        $region65: #{tpu_custom_call.1} parent=27 // pred_check
          %p549 = pneg %p147
        $region66: #{tpu_custom_call.1} parent=27 // pred_check_branch
          %551 = sbr.rel (%p549) target = $region68
        $region67: #{tpu_custom_call.1} parent=27 // pred_region
          %552 = dma.done [#allocation12], 16
        $region68: #{tpu_custom_call.1} parent=27 // pred_fallthru
          _
      $region28: #{tpu_custom_call.1} parent=5 // pred_fallthru
        _
      %p553 = scmp.le.s32.totalorder 2, %s19
      // Predicated region
      $region69: #{tpu_custom_call.1} parent=5 // pred_check
        %p554 = pneg %p553
      $region70: #{tpu_custom_call.1} parent=5 // pred_check_branch
        %556 = sbr.rel (%p554) target = $region72
      $region71: #{tpu_custom_call.1} parent=5 // pred_region
        %s557 = ssub.s32 %s19, 2
      $region72: #{tpu_custom_call.1} parent=5 // pred_fallthru
        _
    $region6: #{tpu_custom_call.1} parent=1 // loop_footer
      %s23 = sadd.s32 1, %s19
    $region7: #{tpu_custom_call.1} parent=1 // loop_footer_branch
      %18 = sbr.rel target = $region3
    $region8: #{tpu_custom_call.1} parent=1 // loop_exit
      _
    %558 = vsyncpa [#allocation6], 1
    %s559 = scalar_lea.sflag [#allocation6], 1
    %560 = vsyncpa %s559, 1
    %561 = vsyncpa [#allocation9], 1
    %s562 = scalar_lea.sflag [#allocation9], 1
    %563 = vsyncpa %s562, 1
    %564 = vsyncpa [#allocation7], 1
    %s565 = scalar_lea.sflag [#allocation7], 1
    %566 = vsyncpa %s565, 1
    %567 = vsyncpa [#allocation12], 1

</llo_original>
